<compile_context>
chip_gen: v5e
topology: v5e:2x2
jax: 0.10.0
libtpu: 0.0.40
codegen_flags: <defaults>
</compile_context>

<pallas_src>
import functools

import jax
import jax.numpy as jnp
from jax.experimental import pallas as pl
from jax.experimental.pallas import tpu as pltpu

_EPS = 1e-5  # PyTorch BatchNorm2d default eps


def _fold_channels(a, C, N):
    """Given a (C*N, HW) array with rows ordered (c, n), return an array of the same
    shape in which every row holds sum_c a[c*N + (row % N)] — i.e. the channel sum,
    tiled back across the channel rows."""
    CN = C * N
    if C & (C - 1) == 0:
        # Doubling sublane rolls: after log2(C) steps row r has accumulated exactly
        # the rows {r + k*N mod CN}, which is r's channel group.  The result is the
        # same for either roll direction (the group is closed under +/- N shifts).
        s = a
        step = N
        while step < CN:
            s = s + pltpu.roll(s, step, axis=0)
            step *= 2
        return s
    # General fallback: explicit slice-sum, then tile back.
    y = a[0:N, :]
    for c in range(1, C):
        y = y + a[c * N:(c + 1) * N, :]
    return jnp.concatenate([y] * C, axis=0)


def _fuzzy_kernel(x_ref, wm1_ref, wm2_ref, sp_ref, out_ref, *, C, N, shifts):
    """x_ref:   (C*N, HW)   input block, row c*N+n = image n, channel c, flat H*W
       wm1_ref: (9*C*N, HW) conv1 weight * boundary mask per (tap, c, n) row
       wm2_ref: (9*C*N, HW) conv2 weight * boundary mask per (tap, c, n) row
       sp_ref:  (6+3C,)     SMEM scalars [A, cen, res, b1, g1, be1, b2[C], g2[C], be2[C]]
       out_ref: (C*N, HW)   row c*N+n = output channel c of image n."""
    CN, HW = x_ref.shape
    inv_bn = 1.0 / (N * HW)        # BN batch-stat count per channel: N*H*W elements

    x = x_ref[...]                                          # (CN, HW): 2 full vregs

    # ---- conv1: Conv2d(C, 1, 3, padding=1) -----------------------------------
    # Per tap: rotate the whole packed block once (XLU), multiply by the
    # weight*mask rows, accumulate.  The boundary masks turn the circular roll
    # into zero padding.
    acc1 = None
    for t, sh in enumerate(shifts):
        xr = pltpu.roll(x, sh, axis=1) if sh else x
        term = xr * wm1_ref[pl.ds(t * CN, CN), :]
        acc1 = term if acc1 is None else acc1 + term
    # Fold the channel rows; every row now holds y[n, p] (tiled across channels).
    y = _fold_channels(acc1, C, N) + sp_ref[3]              # + conv1 bias

    # ---- fuzzy membership (collapsed quadratic) + exp --------------------------
    # sum_{c,k} -((y-mu)/sigma)^2 == -(A*(y-cen)^2 + res); A/cen/res precomputed.
    d = y - sp_ref[1]
    e = jnp.exp(-(sp_ref[0] * d * d + sp_ref[2]))           # EUP

    # ---- bn1: training-mode batch stats (1 channel), centered two-pass var ----
    # Rows are C-fold duplicates of the N real rows, so averaging over CN*HW
    # still yields the true batch mean/variance.
    inv1 = 1.0 / (CN * HW)
    m1 = jnp.sum(e) * inv1
    ce = e - m1
    v1 = jnp.sum(ce * ce) * inv1
    z1 = ce * (sp_ref[4] * jax.lax.rsqrt(v1 + _EPS)) + sp_ref[5]   # still tiled

    # ---- conv2: Conv2d(1, C, 3, padding=1), same roll + weight*mask structure -
    # Because z1 is tiled across the channel rows, row c*N+n of acc2 is directly
    # output channel c of image n.
    acc2 = None
    for t, sh in enumerate(shifts):
        zr = pltpu.roll(z1, sh, axis=1) if sh else z1
        term = zr * wm2_ref[pl.ds(t * CN, CN), :]
        acc2 = term if acc2 is None else acc2 + term

    # ---- bn2: per-channel batch stats (centered two-pass) on resident rows ----
    rows = []
    for c in range(C):
        blk = acc2[c * N:(c + 1) * N, :] + sp_ref[6 + c]    # + conv2 bias
        m = jnp.sum(blk) * inv_bn
        cb = blk - m
        v = jnp.sum(cb * cb) * inv_bn
        rows.append(cb * (sp_ref[6 + C + c] * jax.lax.rsqrt(v + _EPS))
                    + sp_ref[6 + 2 * C + c])
    # Single dense, unmasked (C*N, HW) store.
    out_ref[...] = jnp.concatenate(rows, axis=0).astype(out_ref.dtype)


def fuzzy_layer(x, w1, b1, w2, b2, mu, sigma, g1, be1, g2, be2):
    """x: (N,C,H,W) f32.  w1: (C,3,3) (= conv1.weight[0]), w2: (C,3,3) (= conv2.weight[:,0]),
       b1: (1,), b2: (C,), mu/sigma: (C, n_fuzzy), g*/be*: BatchNorm affine params."""
    N, C, H, W = x.shape
    HW = H * W
    CN = C * N
    f32 = jnp.float32

    # Parameter-only precomputation: collapse the fuzzy double sum into a centered
    # quadratic in y:  sum_{c,k} -((y-mu)/sigma)^2 = -(A*(y-cen)^2 + res).
    sig = sigma.astype(f32)
    muf = mu.astype(f32)
    inv = 1.0 / (sig * sig)
    A = jnp.sum(inv)
    B = jnp.sum(muf * inv)
    D = jnp.sum(muf * muf * inv)
    cen = B / A
    res = D - B * cen                                       # >= 0

    # Static boundary masks for the 9 taps in flat (H*W) layout, plus each tap's
    # flat roll amount.  Tap (dy,dx) reads flat index p + (dy-1)*W + (dx-1); the
    # mask zeroes the row/column wrap so the roll is equivalent to zero padding.
    pidx = jnp.arange(HW)
    hh, ww = pidx // W, pidx % W
    masks, shifts = [], []
    for dy in range(3):
        for dx in range(3):
            valid = ((hh + dy - 1 >= 0) & (hh + dy - 1 < H) &
                     (ww + dx - 1 >= 0) & (ww + dx - 1 < W))
            masks.append(valid.astype(f32))
            shifts.append(((1 - dy) * W + (1 - dx)) % HW)
    mask9 = jnp.stack(masks)                                # (9, HW)

    # Weight-premultiplied mask rows: wm[t*C*N + c*N + n, p] = w[c, t] * mask[t, p].
    def _wm(w):
        wt = jnp.reshape(w, (C, 9)).astype(f32).T           # (9, C)
        a = wt[:, :, None, None] * mask9[:, None, None, :]  # (9, C, 1, HW)
        return jnp.broadcast_to(a, (9, C, N, HW)).reshape(9 * CN, HW)

    wm1 = _wm(w1)
    wm2 = _wm(w2)

    # Channel-major, fully packed input block: row c*N + n = x[n, c, :, :].flat.
    xcn = jnp.transpose(x.astype(f32), (1, 0, 2, 3)).reshape(CN, HW)

    # All remaining scalars in one flat 1-D SMEM array (no SMEM (8,128) padding).
    sp = jnp.concatenate([
        jnp.stack([A, cen, res]),
        jnp.reshape(b1.astype(f32), (1,)),
        jnp.reshape(g1.astype(f32), (1,)),
        jnp.reshape(be1.astype(f32), (1,)),
        jnp.reshape(b2.astype(f32), (C,)),
        jnp.reshape(g2.astype(f32), (C,)),
        jnp.reshape(be2.astype(f32), (C,)),
    ]).astype(f32)

    vmem = pl.BlockSpec(memory_space=pltpu.MemorySpace.VMEM)
    smem = pl.BlockSpec(memory_space=pltpu.MemorySpace.SMEM)
    # Single ungridded call: everything fits in a few hundred KB of VMEM at this
    # shape.  At real F2CAU-Net feature-map sizes this would grow a spatial grid
    # (128-lane-multiple tiles) with a two-pass BN partial-stat combine, an explicit
    # vmem_limit_bytes (v7x has only 64 MiB VMEM), and a "parallel" axis so v7x's
    # second TensorCore is used.
    out = pl.pallas_call(
        functools.partial(_fuzzy_kernel, C=C, N=N, shifts=tuple(shifts)),
        out_shape=jax.ShapeDtypeStruct((CN, HW), f32),
        in_specs=[vmem, vmem, vmem, smem],
        out_specs=vmem,
    )(xcn, wm1, wm2, sp)
    return jnp.transpose(out.reshape(C, N, H, W), (1, 0, 2, 3))


def _reference(x, w1, b1, w2, b2, mu, sigma, g1, be1, g2, be2):
    """Pure-JAX reference mirroring the PyTorch forward (training-mode BN)."""
    N, C, H, W = x.shape
    y = jax.lax.conv_general_dilated(
        x, w1[None], (1, 1), ((1, 1), (1, 1)),
        dimension_numbers=("NCHW", "OIHW", "NCHW"),
        precision=jax.lax.Precision.HIGHEST) + b1[None, :, None, None]
    yv = y.reshape(N, 1, 1, H * W)
    zn = (yv - mu[None, :, :, None]) / sigma[None, :, :, None]      # (N,C,n,HW)
    tmp = jnp.sum(-(zn ** 2), axis=(1, 2)).reshape(N, 1, H, W)
    e = jnp.exp(tmp)
    m1 = jnp.mean(e)
    v1 = jnp.mean((e - m1) ** 2)
    z1 = g1[None, :, None, None] * (e - m1) / jnp.sqrt(v1 + _EPS) + be1[None, :, None, None]
    c2 = jax.lax.conv_general_dilated(
        z1, w2[:, None], (1, 1), ((1, 1), (1, 1)),
        dimension_numbers=("NCHW", "OIHW", "NCHW"),
        precision=jax.lax.Precision.HIGHEST) + b2[None, :, None, None]
    m2 = jnp.mean(c2, axis=(0, 2, 3), keepdims=True)
    v2 = jnp.mean((c2 - m2) ** 2, axis=(0, 2, 3), keepdims=True)
    return g2[None, :, None, None] * (c2 - m2) / jnp.sqrt(v2 + _EPS) + be2[None, :, None, None]


if __name__ == "__main__":
    N, C, H, W = 2, 4, 16, 16
    n_fuzzy = 2

    key = jax.random.PRNGKey(0)
    ks = jax.random.split(key, 8)

    x = jax.random.normal(ks[0], (N, C, H, W), jnp.float32)

    # Deterministic synthetic parameters (shapes match nn.Conv2d / nn.Parameter).
    fan1 = float(C * 9)
    w1 = jax.random.uniform(ks[1], (C, 3, 3), jnp.float32, -1.0, 1.0) / jnp.sqrt(fan1)
    b1 = jax.random.uniform(ks[2], (1,), jnp.float32, -1.0, 1.0) / jnp.sqrt(fan1)
    fan2 = float(1 * 9)
    w2 = jax.random.uniform(ks[3], (C, 3, 3), jnp.float32, -1.0, 1.0) / jnp.sqrt(fan2)
    b2 = jax.random.uniform(ks[4], (C,), jnp.float32, -1.0, 1.0) / jnp.sqrt(fan2)
    mu = jax.random.normal(ks[5], (C, n_fuzzy), jnp.float32)
    sigma = jax.random.normal(ks[6], (C, n_fuzzy), jnp.float32)
    # Keep |sigma| away from zero so ((y-mu)/sigma)^2 stays well conditioned
    # (raw randn sigma makes the allclose tolerance fragile).
    sigma = jnp.where(sigma >= 0, 1.0, -1.0) * jnp.maximum(jnp.abs(sigma), 0.3)
    g1 = jnp.ones((1,), jnp.float32)
    be1 = jnp.zeros((1,), jnp.float32)
    g2 = jnp.ones((C,), jnp.float32)
    be2 = jnp.zeros((C,), jnp.float32)

    out = fuzzy_layer(x, w1, b1, w2, b2, mu, sigma, g1, be1, g2, be2)
    out = jax.block_until_ready(out)
    assert out.shape == (N, C, H, W) and out.dtype == jnp.float32

    ref = _reference(x, w1, b1, w2, b2, mu, sigma, g1, be1, g2, be2)
    assert jnp.allclose(out, ref, rtol=1e-3, atol=1e-3), \
        f"max abs err = {jnp.max(jnp.abs(out - ref))}"

    print("KERNEL_OK")
</pallas_src>

<mosaic_0001>
module attributes {stable_mosaic.version = 11 : i64} {
  func.func @_fuzzy_kernel(%arg0: memref<8x256xf32, #tpu.memory_space<vmem>>, %arg1: memref<72x256xf32, #tpu.memory_space<vmem>>, %arg2: memref<72x256xf32, #tpu.memory_space<vmem>>, %arg3: memref<18xf32, #tpu.memory_space<smem>>, %arg4: memref<8x256xf32, #tpu.memory_space<vmem>>) attributes {dimension_semantics = [], scalar_prefetch = 0 : i64, scratch_operands = 0 : i64, tpu.core_type = #tpu.core_type<tc>} {
    %c0 = arith.constant 0 : index
    %c0_0 = arith.constant 0 : index
    %0 = vector.load %arg0[%c0, %c0_0] : memref<8x256xf32, #tpu.memory_space<vmem>>, vector<8x256xf32>
    %c17_i32 = arith.constant 17 : i32
    %1 = tpu.dynamic_rotate %0 by %c17_i32 dim 1 : vector<8x256xf32>, i32 -> vector<8x256xf32>
    %c0_1 = arith.constant 0 : index
    %c0_2 = arith.constant 0 : index
    %2 = vector.load %arg1[%c0_1, %c0_2] : memref<72x256xf32, #tpu.memory_space<vmem>>, vector<8x256xf32>
    %3 = arith.mulf %1, %2 : vector<8x256xf32>
    %c16_i32 = arith.constant 16 : i32
    %4 = tpu.dynamic_rotate %0 by %c16_i32 dim 1 : vector<8x256xf32>, i32 -> vector<8x256xf32>
    %c8 = arith.constant 8 : index
    %c0_3 = arith.constant 0 : index
    %5 = vector.load %arg1[%c8, %c0_3] : memref<72x256xf32, #tpu.memory_space<vmem>>, vector<8x256xf32>
    %6 = arith.mulf %4, %5 : vector<8x256xf32>
    %7 = arith.addf %3, %6 : vector<8x256xf32>
    %c15_i32 = arith.constant 15 : i32
    %8 = tpu.dynamic_rotate %0 by %c15_i32 dim 1 : vector<8x256xf32>, i32 -> vector<8x256xf32>
    %c16 = arith.constant 16 : index
    %c0_4 = arith.constant 0 : index
    %9 = vector.load %arg1[%c16, %c0_4] : memref<72x256xf32, #tpu.memory_space<vmem>>, vector<8x256xf32>
    %10 = arith.mulf %8, %9 : vector<8x256xf32>
    %11 = arith.addf %7, %10 : vector<8x256xf32>
    %c1_i32 = arith.constant 1 : i32
    %12 = tpu.dynamic_rotate %0 by %c1_i32 dim 1 : vector<8x256xf32>, i32 -> vector<8x256xf32>
    %c24 = arith.constant 24 : index
    %c0_5 = arith.constant 0 : index
    %13 = vector.load %arg1[%c24, %c0_5] : memref<72x256xf32, #tpu.memory_space<vmem>>, vector<8x256xf32>
    %14 = arith.mulf %12, %13 : vector<8x256xf32>
    %15 = arith.addf %11, %14 : vector<8x256xf32>
    %c32 = arith.constant 32 : index
    %c0_6 = arith.constant 0 : index
    %16 = vector.load %arg1[%c32, %c0_6] : memref<72x256xf32, #tpu.memory_space<vmem>>, vector<8x256xf32>
    %17 = arith.mulf %0, %16 : vector<8x256xf32>
    %18 = arith.addf %15, %17 : vector<8x256xf32>
    %c255_i32 = arith.constant 255 : i32
    %19 = tpu.dynamic_rotate %0 by %c255_i32 dim 1 : vector<8x256xf32>, i32 -> vector<8x256xf32>
    %c40 = arith.constant 40 : index
    %c0_7 = arith.constant 0 : index
    %20 = vector.load %arg1[%c40, %c0_7] : memref<72x256xf32, #tpu.memory_space<vmem>>, vector<8x256xf32>
    %21 = arith.mulf %19, %20 : vector<8x256xf32>
    %22 = arith.addf %18, %21 : vector<8x256xf32>
    %c241_i32 = arith.constant 241 : i32
    %23 = tpu.dynamic_rotate %0 by %c241_i32 dim 1 : vector<8x256xf32>, i32 -> vector<8x256xf32>
    %c48 = arith.constant 48 : index
    %c0_8 = arith.constant 0 : index
    %24 = vector.load %arg1[%c48, %c0_8] : memref<72x256xf32, #tpu.memory_space<vmem>>, vector<8x256xf32>
    %25 = arith.mulf %23, %24 : vector<8x256xf32>
    %26 = arith.addf %22, %25 : vector<8x256xf32>
    %c240_i32 = arith.constant 240 : i32
    %27 = tpu.dynamic_rotate %0 by %c240_i32 dim 1 : vector<8x256xf32>, i32 -> vector<8x256xf32>
    %c56 = arith.constant 56 : index
    %c0_9 = arith.constant 0 : index
    %28 = vector.load %arg1[%c56, %c0_9] : memref<72x256xf32, #tpu.memory_space<vmem>>, vector<8x256xf32>
    %29 = arith.mulf %27, %28 : vector<8x256xf32>
    %30 = arith.addf %26, %29 : vector<8x256xf32>
    %c239_i32 = arith.constant 239 : i32
    %31 = tpu.dynamic_rotate %0 by %c239_i32 dim 1 : vector<8x256xf32>, i32 -> vector<8x256xf32>
    %c64 = arith.constant 64 : index
    %c0_10 = arith.constant 0 : index
    %32 = vector.load %arg1[%c64, %c0_10] : memref<72x256xf32, #tpu.memory_space<vmem>>, vector<8x256xf32>
    %33 = arith.mulf %31, %32 : vector<8x256xf32>
    %34 = arith.addf %30, %33 : vector<8x256xf32>
    %c2_i32 = arith.constant 2 : i32
    %35 = tpu.dynamic_rotate %34 by %c2_i32 dim 0 : vector<8x256xf32>, i32 -> vector<8x256xf32>
    %36 = arith.addf %34, %35 : vector<8x256xf32>
    %c4_i32 = arith.constant 4 : i32
    %37 = tpu.dynamic_rotate %36 by %c4_i32 dim 0 : vector<8x256xf32>, i32 -> vector<8x256xf32>
    %38 = arith.addf %36, %37 : vector<8x256xf32>
    %c3 = arith.constant 3 : index
    %39 = memref.load %arg3[%c3] : memref<18xf32, #tpu.memory_space<smem>>
    %40 = vector.broadcast %39 : f32 to vector<8x256xf32>
    %41 = arith.addf %38, %40 : vector<8x256xf32>
    %c1 = arith.constant 1 : index
    %42 = memref.load %arg3[%c1] : memref<18xf32, #tpu.memory_space<smem>>
    %43 = vector.broadcast %42 : f32 to vector<8x256xf32>
    %44 = arith.subf %41, %43 : vector<8x256xf32>
    %c0_11 = arith.constant 0 : index
    %45 = memref.load %arg3[%c0_11] : memref<18xf32, #tpu.memory_space<smem>>
    %46 = vector.broadcast %45 : f32 to vector<8x256xf32>
    %47 = arith.mulf %46, %44 : vector<8x256xf32>
    %48 = arith.mulf %47, %44 : vector<8x256xf32>
    %c2 = arith.constant 2 : index
    %49 = memref.load %arg3[%c2] : memref<18xf32, #tpu.memory_space<smem>>
    %50 = vector.broadcast %49 : f32 to vector<8x256xf32>
    %51 = arith.addf %48, %50 : vector<8x256xf32>
    %cst = arith.constant 0.000000e+00 : f32
    %52 = vector.broadcast %cst : f32 to vector<8x256xf32>
    %53 = arith.subf %52, %51 : vector<8x256xf32>
    %54 = math.exp %53 : vector<8x256xf32>
    %55 = vector.shape_cast %54 : vector<8x256xf32> to vector<1x8x256xf32>
    %cst_12 = arith.constant dense<0.000000e+00> : vector<1xf32>
    %56 = vector.multi_reduction <add>, %55, %cst_12 [1, 2] : vector<1x8x256xf32> to vector<1xf32>
    %57 = vector.shape_cast %56 : vector<1xf32> to vector<1x1x1xf32>
    %58 = vector.extract %57[0, 0, 0] : f32 from vector<1x1x1xf32>
    %cst_13 = arith.constant 4.8828125E-4 : f32
    %59 = arith.mulf %58, %cst_13 : f32
    %60 = vector.broadcast %59 : f32 to vector<8x256xf32>
    %61 = arith.subf %54, %60 : vector<8x256xf32>
    %62 = arith.mulf %61, %61 : vector<8x256xf32>
    %63 = vector.shape_cast %62 : vector<8x256xf32> to vector<1x8x256xf32>
    %cst_14 = arith.constant dense<0.000000e+00> : vector<1xf32>
    %64 = vector.multi_reduction <add>, %63, %cst_14 [1, 2] : vector<1x8x256xf32> to vector<1xf32>
    %65 = vector.shape_cast %64 : vector<1xf32> to vector<1x1x1xf32>
    %66 = vector.extract %65[0, 0, 0] : f32 from vector<1x1x1xf32>
    %cst_15 = arith.constant 4.8828125E-4 : f32
    %67 = arith.mulf %66, %cst_15 : f32
    %c4 = arith.constant 4 : index
    %68 = memref.load %arg3[%c4] : memref<18xf32, #tpu.memory_space<smem>>
    %cst_16 = arith.constant 9.99999974E-6 : f32
    %69 = arith.addf %67, %cst_16 : f32
    %70 = math.rsqrt %69 : f32
    %71 = arith.mulf %68, %70 : f32
    %72 = vector.broadcast %71 : f32 to vector<8x256xf32>
    %73 = arith.mulf %61, %72 : vector<8x256xf32>
    %c5 = arith.constant 5 : index
    %74 = memref.load %arg3[%c5] : memref<18xf32, #tpu.memory_space<smem>>
    %75 = vector.broadcast %74 : f32 to vector<8x256xf32>
    %76 = arith.addf %73, %75 : vector<8x256xf32>
    %c17_i32_17 = arith.constant 17 : i32
    %77 = tpu.dynamic_rotate %76 by %c17_i32_17 dim 1 : vector<8x256xf32>, i32 -> vector<8x256xf32>
    %c0_18 = arith.constant 0 : index
    %c0_19 = arith.constant 0 : index
    %78 = vector.load %arg2[%c0_18, %c0_19] : memref<72x256xf32, #tpu.memory_space<vmem>>, vector<8x256xf32>
    %79 = arith.mulf %77, %78 : vector<8x256xf32>
    %c16_i32_20 = arith.constant 16 : i32
    %80 = tpu.dynamic_rotate %76 by %c16_i32_20 dim 1 : vector<8x256xf32>, i32 -> vector<8x256xf32>
    %c8_21 = arith.constant 8 : index
    %c0_22 = arith.constant 0 : index
    %81 = vector.load %arg2[%c8_21, %c0_22] : memref<72x256xf32, #tpu.memory_space<vmem>>, vector<8x256xf32>
    %82 = arith.mulf %80, %81 : vector<8x256xf32>
    %83 = arith.addf %79, %82 : vector<8x256xf32>
    %c15_i32_23 = arith.constant 15 : i32
    %84 = tpu.dynamic_rotate %76 by %c15_i32_23 dim 1 : vector<8x256xf32>, i32 -> vector<8x256xf32>
    %c16_24 = arith.constant 16 : index
    %c0_25 = arith.constant 0 : index
    %85 = vector.load %arg2[%c16_24, %c0_25] : memref<72x256xf32, #tpu.memory_space<vmem>>, vector<8x256xf32>
    %86 = arith.mulf %84, %85 : vector<8x256xf32>
    %87 = arith.addf %83, %86 : vector<8x256xf32>
    %c1_i32_26 = arith.constant 1 : i32
    %88 = tpu.dynamic_rotate %76 by %c1_i32_26 dim 1 : vector<8x256xf32>, i32 -> vector<8x256xf32>
    %c24_27 = arith.constant 24 : index
    %c0_28 = arith.constant 0 : index
    %89 = vector.load %arg2[%c24_27, %c0_28] : memref<72x256xf32, #tpu.memory_space<vmem>>, vector<8x256xf32>
    %90 = arith.mulf %88, %89 : vector<8x256xf32>
    %91 = arith.addf %87, %90 : vector<8x256xf32>
    %c32_29 = arith.constant 32 : index
    %c0_30 = arith.constant 0 : index
    %92 = vector.load %arg2[%c32_29, %c0_30] : memref<72x256xf32, #tpu.memory_space<vmem>>, vector<8x256xf32>
    %93 = arith.mulf %76, %92 : vector<8x256xf32>
    %94 = arith.addf %91, %93 : vector<8x256xf32>
    %c255_i32_31 = arith.constant 255 : i32
    %95 = tpu.dynamic_rotate %76 by %c255_i32_31 dim 1 : vector<8x256xf32>, i32 -> vector<8x256xf32>
    %c40_32 = arith.constant 40 : index
    %c0_33 = arith.constant 0 : index
    %96 = vector.load %arg2[%c40_32, %c0_33] : memref<72x256xf32, #tpu.memory_space<vmem>>, vector<8x256xf32>
    %97 = arith.mulf %95, %96 : vector<8x256xf32>
    %98 = arith.addf %94, %97 : vector<8x256xf32>
    %c241_i32_34 = arith.constant 241 : i32
    %99 = tpu.dynamic_rotate %76 by %c241_i32_34 dim 1 : vector<8x256xf32>, i32 -> vector<8x256xf32>
    %c48_35 = arith.constant 48 : index
    %c0_36 = arith.constant 0 : index
    %100 = vector.load %arg2[%c48_35, %c0_36] : memref<72x256xf32, #tpu.memory_space<vmem>>, vector<8x256xf32>
    %101 = arith.mulf %99, %100 : vector<8x256xf32>
    %102 = arith.addf %98, %101 : vector<8x256xf32>
    %c240_i32_37 = arith.constant 240 : i32
    %103 = tpu.dynamic_rotate %76 by %c240_i32_37 dim 1 : vector<8x256xf32>, i32 -> vector<8x256xf32>
    %c56_38 = arith.constant 56 : index
    %c0_39 = arith.constant 0 : index
    %104 = vector.load %arg2[%c56_38, %c0_39] : memref<72x256xf32, #tpu.memory_space<vmem>>, vector<8x256xf32>
    %105 = arith.mulf %103, %104 : vector<8x256xf32>
    %106 = arith.addf %102, %105 : vector<8x256xf32>
    %c239_i32_40 = arith.constant 239 : i32
    %107 = tpu.dynamic_rotate %76 by %c239_i32_40 dim 1 : vector<8x256xf32>, i32 -> vector<8x256xf32>
    %c64_41 = arith.constant 64 : index
    %c0_42 = arith.constant 0 : index
    %108 = vector.load %arg2[%c64_41, %c0_42] : memref<72x256xf32, #tpu.memory_space<vmem>>, vector<8x256xf32>
    %109 = arith.mulf %107, %108 : vector<8x256xf32>
    %110 = arith.addf %106, %109 : vector<8x256xf32>
    %111 = vector.extract_strided_slice %110 {offsets = [0, 0], sizes = [2, 256], strides = [1, 1]} : vector<8x256xf32> to vector<2x256xf32>
    %c6 = arith.constant 6 : index
    %112 = memref.load %arg3[%c6] : memref<18xf32, #tpu.memory_space<smem>>
    %113 = vector.broadcast %112 : f32 to vector<2x256xf32>
    %114 = arith.addf %111, %113 : vector<2x256xf32>
    %115 = vector.shape_cast %114 : vector<2x256xf32> to vector<1x2x256xf32>
    %cst_43 = arith.constant dense<0.000000e+00> : vector<1xf32>
    %116 = vector.multi_reduction <add>, %115, %cst_43 [1, 2] : vector<1x2x256xf32> to vector<1xf32>
    %117 = vector.shape_cast %116 : vector<1xf32> to vector<1x1x1xf32>
    %118 = vector.extract %117[0, 0, 0] : f32 from vector<1x1x1xf32>
    %cst_44 = arith.constant 0.001953125 : f32
    %119 = arith.mulf %118, %cst_44 : f32
    %120 = vector.broadcast %119 : f32 to vector<2x256xf32>
    %121 = arith.subf %114, %120 : vector<2x256xf32>
    %122 = arith.mulf %121, %121 : vector<2x256xf32>
    %123 = vector.shape_cast %122 : vector<2x256xf32> to vector<1x2x256xf32>
    %cst_45 = arith.constant dense<0.000000e+00> : vector<1xf32>
    %124 = vector.multi_reduction <add>, %123, %cst_45 [1, 2] : vector<1x2x256xf32> to vector<1xf32>
    %125 = vector.shape_cast %124 : vector<1xf32> to vector<1x1x1xf32>
    %126 = vector.extract %125[0, 0, 0] : f32 from vector<1x1x1xf32>
    %cst_46 = arith.constant 0.001953125 : f32
    %127 = arith.mulf %126, %cst_46 : f32
    %c10 = arith.constant 10 : index
    %128 = memref.load %arg3[%c10] : memref<18xf32, #tpu.memory_space<smem>>
    %cst_47 = arith.constant 9.99999974E-6 : f32
    %129 = arith.addf %127, %cst_47 : f32
    %130 = math.rsqrt %129 : f32
    %131 = arith.mulf %128, %130 : f32
    %132 = vector.broadcast %131 : f32 to vector<2x256xf32>
    %133 = arith.mulf %121, %132 : vector<2x256xf32>
    %c14 = arith.constant 14 : index
    %134 = memref.load %arg3[%c14] : memref<18xf32, #tpu.memory_space<smem>>
    %135 = vector.broadcast %134 : f32 to vector<2x256xf32>
    %136 = arith.addf %133, %135 : vector<2x256xf32>
    %137 = vector.extract_strided_slice %110 {offsets = [2, 0], sizes = [2, 256], strides = [1, 1]} : vector<8x256xf32> to vector<2x256xf32>
    %c7 = arith.constant 7 : index
    %138 = memref.load %arg3[%c7] : memref<18xf32, #tpu.memory_space<smem>>
    %139 = vector.broadcast %138 : f32 to vector<2x256xf32>
    %140 = arith.addf %137, %139 : vector<2x256xf32>
    %141 = vector.shape_cast %140 : vector<2x256xf32> to vector<1x2x256xf32>
    %cst_48 = arith.constant dense<0.000000e+00> : vector<1xf32>
    %142 = vector.multi_reduction <add>, %141, %cst_48 [1, 2] : vector<1x2x256xf32> to vector<1xf32>
    %143 = vector.shape_cast %142 : vector<1xf32> to vector<1x1x1xf32>
    %144 = vector.extract %143[0, 0, 0] : f32 from vector<1x1x1xf32>
    %cst_49 = arith.constant 0.001953125 : f32
    %145 = arith.mulf %144, %cst_49 : f32
    %146 = vector.broadcast %145 : f32 to vector<2x256xf32>
    %147 = arith.subf %140, %146 : vector<2x256xf32>
    %148 = arith.mulf %147, %147 : vector<2x256xf32>
    %149 = vector.shape_cast %148 : vector<2x256xf32> to vector<1x2x256xf32>
    %cst_50 = arith.constant dense<0.000000e+00> : vector<1xf32>
    %150 = vector.multi_reduction <add>, %149, %cst_50 [1, 2] : vector<1x2x256xf32> to vector<1xf32>
    %151 = vector.shape_cast %150 : vector<1xf32> to vector<1x1x1xf32>
    %152 = vector.extract %151[0, 0, 0] : f32 from vector<1x1x1xf32>
    %cst_51 = arith.constant 0.001953125 : f32
    %153 = arith.mulf %152, %cst_51 : f32
    %c11 = arith.constant 11 : index
    %154 = memref.load %arg3[%c11] : memref<18xf32, #tpu.memory_space<smem>>
    %cst_52 = arith.constant 9.99999974E-6 : f32
    %155 = arith.addf %153, %cst_52 : f32
    %156 = math.rsqrt %155 : f32
    %157 = arith.mulf %154, %156 : f32
    %158 = vector.broadcast %157 : f32 to vector<2x256xf32>
    %159 = arith.mulf %147, %158 : vector<2x256xf32>
    %c15 = arith.constant 15 : index
    %160 = memref.load %arg3[%c15] : memref<18xf32, #tpu.memory_space<smem>>
    %161 = vector.broadcast %160 : f32 to vector<2x256xf32>
    %162 = arith.addf %159, %161 : vector<2x256xf32>
    %163 = vector.extract_strided_slice %110 {offsets = [4, 0], sizes = [2, 256], strides = [1, 1]} : vector<8x256xf32> to vector<2x256xf32>
    %c8_53 = arith.constant 8 : index
    %164 = memref.load %arg3[%c8_53] : memref<18xf32, #tpu.memory_space<smem>>
    %165 = vector.broadcast %164 : f32 to vector<2x256xf32>
    %166 = arith.addf %163, %165 : vector<2x256xf32>
    %167 = vector.shape_cast %166 : vector<2x256xf32> to vector<1x2x256xf32>
    %cst_54 = arith.constant dense<0.000000e+00> : vector<1xf32>
    %168 = vector.multi_reduction <add>, %167, %cst_54 [1, 2] : vector<1x2x256xf32> to vector<1xf32>
    %169 = vector.shape_cast %168 : vector<1xf32> to vector<1x1x1xf32>
    %170 = vector.extract %169[0, 0, 0] : f32 from vector<1x1x1xf32>
    %cst_55 = arith.constant 0.001953125 : f32
    %171 = arith.mulf %170, %cst_55 : f32
    %172 = vector.broadcast %171 : f32 to vector<2x256xf32>
    %173 = arith.subf %166, %172 : vector<2x256xf32>
    %174 = arith.mulf %173, %173 : vector<2x256xf32>
    %175 = vector.shape_cast %174 : vector<2x256xf32> to vector<1x2x256xf32>
    %cst_56 = arith.constant dense<0.000000e+00> : vector<1xf32>
    %176 = vector.multi_reduction <add>, %175, %cst_56 [1, 2] : vector<1x2x256xf32> to vector<1xf32>
    %177 = vector.shape_cast %176 : vector<1xf32> to vector<1x1x1xf32>
    %178 = vector.extract %177[0, 0, 0] : f32 from vector<1x1x1xf32>
    %cst_57 = arith.constant 0.001953125 : f32
    %179 = arith.mulf %178, %cst_57 : f32
    %c12 = arith.constant 12 : index
    %180 = memref.load %arg3[%c12] : memref<18xf32, #tpu.memory_space<smem>>
    %cst_58 = arith.constant 9.99999974E-6 : f32
    %181 = arith.addf %179, %cst_58 : f32
    %182 = math.rsqrt %181 : f32
    %183 = arith.mulf %180, %182 : f32
    %184 = vector.broadcast %183 : f32 to vector<2x256xf32>
    %185 = arith.mulf %173, %184 : vector<2x256xf32>
    %c16_59 = arith.constant 16 : index
    %186 = memref.load %arg3[%c16_59] : memref<18xf32, #tpu.memory_space<smem>>
    %187 = vector.broadcast %186 : f32 to vector<2x256xf32>
    %188 = arith.addf %185, %187 : vector<2x256xf32>
    %189 = vector.extract_strided_slice %110 {offsets = [6, 0], sizes = [2, 256], strides = [1, 1]} : vector<8x256xf32> to vector<2x256xf32>
    %c9 = arith.constant 9 : index
    %190 = memref.load %arg3[%c9] : memref<18xf32, #tpu.memory_space<smem>>
    %191 = vector.broadcast %190 : f32 to vector<2x256xf32>
    %192 = arith.addf %189, %191 : vector<2x256xf32>
    %193 = vector.shape_cast %192 : vector<2x256xf32> to vector<1x2x256xf32>
    %cst_60 = arith.constant dense<0.000000e+00> : vector<1xf32>
    %194 = vector.multi_reduction <add>, %193, %cst_60 [1, 2] : vector<1x2x256xf32> to vector<1xf32>
    %195 = vector.shape_cast %194 : vector<1xf32> to vector<1x1x1xf32>
    %196 = vector.extract %195[0, 0, 0] : f32 from vector<1x1x1xf32>
    %cst_61 = arith.constant 0.001953125 : f32
    %197 = arith.mulf %196, %cst_61 : f32
    %198 = vector.broadcast %197 : f32 to vector<2x256xf32>
    %199 = arith.subf %192, %198 : vector<2x256xf32>
    %200 = arith.mulf %199, %199 : vector<2x256xf32>
    %201 = vector.shape_cast %200 : vector<2x256xf32> to vector<1x2x256xf32>
    %cst_62 = arith.constant dense<0.000000e+00> : vector<1xf32>
    %202 = vector.multi_reduction <add>, %201, %cst_62 [1, 2] : vector<1x2x256xf32> to vector<1xf32>
    %203 = vector.shape_cast %202 : vector<1xf32> to vector<1x1x1xf32>
    %204 = vector.extract %203[0, 0, 0] : f32 from vector<1x1x1xf32>
    %cst_63 = arith.constant 0.001953125 : f32
    %205 = arith.mulf %204, %cst_63 : f32
    %c13 = arith.constant 13 : index
    %206 = memref.load %arg3[%c13] : memref<18xf32, #tpu.memory_space<smem>>
    %cst_64 = arith.constant 9.99999974E-6 : f32
    %207 = arith.addf %205, %cst_64 : f32
    %208 = math.rsqrt %207 : f32
    %209 = arith.mulf %206, %208 : f32
    %210 = vector.broadcast %209 : f32 to vector<2x256xf32>
    %211 = arith.mulf %199, %210 : vector<2x256xf32>
    %c17 = arith.constant 17 : index
    %212 = memref.load %arg3[%c17] : memref<18xf32, #tpu.memory_space<smem>>
    %213 = vector.broadcast %212 : f32 to vector<2x256xf32>
    %214 = arith.addf %211, %213 : vector<2x256xf32>
    %215 = tpu.concatenate %136, %162, %188, %214 in 0 : vector<2x256xf32>, vector<2x256xf32>, vector<2x256xf32>, vector<2x256xf32> -> vector<8x256xf32>
    %c0_65 = arith.constant 0 : index
    %c0_66 = arith.constant 0 : index
    %216 = vector.load %arg4[%c0_65, %c0_66] : memref<8x256xf32, #tpu.memory_space<vmem>>, vector<8x256xf32>
    tpu.vector_store %arg4[%c0_65, %c0_66], %215 {strides = array<i32>} : memref<8x256xf32, #tpu.memory_space<vmem>>, vector<8x256xf32>,
    return
  }
}

</mosaic_0001>

<llo_original>
// kernel: tpu_custom_call.1
$region0: #{tpu_custom_call.1}
  #allocation0 [shape = 'u32[]', space=smem, size = 0x4, offset = 0x4, fixed_abs, tag = 'smem constant byte address 0x4 - core index']
  #allocation1 [shape = 'u32[72,128]{1,0:T(1,128)}', space=vmem, size = 0x9000, scoped, tag = 'internal scratch']
  %s0 = inlined_call_operand.hbm [shape: f32[8,256], index: 0, kind: input, shape index: {}]
  %s1 = inlined_call_operand.hbm [shape: f32[72,256], index: 1, kind: input, shape index: {}]
  %s2 = inlined_call_operand.hbm [shape: f32[72,256], index: 2, kind: input, shape index: {}]
  %s3 = inlined_call_operand.vmem [shape: f32[18], index: 3, kind: input, shape index: {}]
  %s4 = inlined_call_operand.hbm [shape: f32[8,256], index: 4, kind: output, shape index: {}]
  %s5 = sld [smem:[#allocation0]]
  $region42: #{tpu_custom_call.1} parent=0
    _
  %s7 = ssub.s32 1, %s5
  %s8 = scalar_select 0, %s7, %s5
  $region1: #{tpu_custom_call.1} parent=0
    #allocation2 [shape = 'u8[8192]{0}', space=vmem, size = 0x2000, scoped, tag = 'input window, operand 0, single buffered']
    #allocation3 [shape = 's32[1]{0}', space=sflag, size = 0x4, scoped, tag = 'scoped memory for tpu_custom_call.1']
    #allocation4 [shape = 's32[1]{0}', space=sflag, size = 0x4, scoped, tag = 'scoped memory for tpu_custom_call.1']
    #allocation5 [shape = 's32[1]{0}', space=sflag, size = 0x4, scoped, tag = 'scoped memory for tpu_custom_call.1']
    #allocation6 [shape = 'u8[73728]{0}', space=vmem, size = 0x12000, scoped, tag = 'input window, operand 1, single buffered']
    #allocation7 [shape = 's32[1]{0}', space=sflag, size = 0x4, scoped, tag = 'scoped memory for tpu_custom_call.1']
    #allocation8 [shape = 'u8[73728]{0}', space=vmem, size = 0x12000, scoped, tag = 'input window, operand 2, single buffered']
    #allocation9 [shape = 'u8[512]{0}', space=smem, size = 0x200, scoped, tag = 'input window, operand 3, single buffered']
    #allocation10 [shape = 'u8[8192]{0}', space=vmem, size = 0x2000, scoped, tag = 'output window, operand 0, single buffered']
    %9 = vsyncpa [#allocation3], 0
    %10 = vsyncpa [#allocation7], 0
    %11 = vsyncpa [#allocation5], 0
    %12 = vsyncpa [#allocation4], 0
    // Predicated region
    $region2: #{tpu_custom_call.1} parent=1 // pred_check
      _
    $region3: #{tpu_custom_call.1} parent=1 // pred_check_branch
      %14 = sbr.rel (0) target = $region5
    $region4: #{tpu_custom_call.1} parent=1 // pred_region
      %16 = vsyncadd [#allocation3], 0
      %s18 = sshll.u32 %s0, 4
      %s19 = int_to_ptr.hbm [resolvable:$true] %s18
      %s20 = sshll.u32 [#allocation2], 4
      %s21 = int_to_ptr.vmem [resolvable:$true] %s20
      %23 = dma.hbm_to_vmem [thread:$0]  %s19, 256, %s21, [#allocation3]
    $region5: #{tpu_custom_call.1} parent=1 // pred_fallthru
      _
    // Predicated region
    $region6: #{tpu_custom_call.1} parent=1 // pred_check
      _
    $region7: #{tpu_custom_call.1} parent=1 // pred_check_branch
      %25 = sbr.rel (0) target = $region9
    $region8: #{tpu_custom_call.1} parent=1 // pred_region
      %27 = vsyncadd [#allocation7], 0
      %s28 = sshll.u32 %s1, 4
      %s29 = int_to_ptr.hbm [resolvable:$true] %s28
      %s30 = sshll.u32 [#allocation6], 4
      %s31 = int_to_ptr.vmem [resolvable:$true] %s30
      %36 = dma.hbm_to_vmem [thread:$0]  %s29, 2304, %s31, [#allocation7], 256, 256, 16
    $region9: #{tpu_custom_call.1} parent=1 // pred_fallthru
      _
    // Predicated region
    $region10: #{tpu_custom_call.1} parent=1 // pred_check
      _
    $region11: #{tpu_custom_call.1} parent=1 // pred_check_branch
      %38 = sbr.rel (0) target = $region13
    $region12: #{tpu_custom_call.1} parent=1 // pred_region
      %40 = vsyncadd [#allocation7], 0
      %s41 = sshll.u32 %s2, 4
      %s42 = int_to_ptr.hbm [resolvable:$true] %s41
      %s43 = sshll.u32 [#allocation8], 4
      %s44 = int_to_ptr.vmem [resolvable:$true] %s43
      %49 = dma.hbm_to_vmem [thread:$0]  %s42, 2304, %s44, [#allocation7], 256, 256, 16
    $region13: #{tpu_custom_call.1} parent=1 // pred_fallthru
      _
    // Predicated region
    $region14: #{tpu_custom_call.1} parent=1 // pred_check
      _
    $region15: #{tpu_custom_call.1} parent=1 // pred_check_branch
      %51 = sbr.rel (0) target = $region17
    $region16: #{tpu_custom_call.1} parent=1 // pred_region
      %53 = vsyncadd [#allocation5], 0
      %s55 = sshll.u32 %s3, 4
      %s56 = int_to_ptr.vmem [resolvable:$true] %s55
      %58 = dma.vmem_to_smem %s56, 16, [#allocation9], [#allocation5]
    $region17: #{tpu_custom_call.1} parent=1 // pred_fallthru
      _
    // Predicated region
    $region18: #{tpu_custom_call.1} parent=1 // pred_check
      _
    $region19: #{tpu_custom_call.1} parent=1 // pred_check_branch
      %60 = sbr.rel (0) target = $region21
    $region20: #{tpu_custom_call.1} parent=1 // pred_region
      %62 = dma.done [#allocation3], 256
    $region21: #{tpu_custom_call.1} parent=1 // pred_fallthru
      _
    // Predicated region
    $region22: #{tpu_custom_call.1} parent=1 // pred_check
      _
    $region23: #{tpu_custom_call.1} parent=1 // pred_check_branch
      %64 = sbr.rel (0) target = $region25
    $region24: #{tpu_custom_call.1} parent=1 // pred_region
      %66 = dma.done [#allocation7], 2304
    $region25: #{tpu_custom_call.1} parent=1 // pred_fallthru
      _
    // Predicated region
    $region26: #{tpu_custom_call.1} parent=1 // pred_check
      _
    $region27: #{tpu_custom_call.1} parent=1 // pred_check_branch
      %68 = sbr.rel (0) target = $region29
    $region28: #{tpu_custom_call.1} parent=1 // pred_region
      %70 = dma.done [#allocation7], 2304
    $region29: #{tpu_custom_call.1} parent=1 // pred_fallthru
      _
    // Predicated region
    $region30: #{tpu_custom_call.1} parent=1 // pred_check
      _
    $region31: #{tpu_custom_call.1} parent=1 // pred_check_branch
      %72 = sbr.rel (0) target = $region33
    $region32: #{tpu_custom_call.1} parent=1 // pred_region
      %74 = dma.done [#allocation5], 16
    $region33: #{tpu_custom_call.1} parent=1 // pred_fallthru
      _
    %75 = sfence
    %v76 = vld [vmem:[#allocation2] sm:$0xff]
    %v77 = vld [vmem:[#allocation2 + $0x8] sm:$0xff]
    %78 = vrot.lane.b32.xlu0 %v76, 17
    %v79 = vpop.permute.xlu0 %78
    %80 = vrot.lane.b32.xlu0 %v77, 17
    %v81 = vpop.permute.xlu0 %80
    %v82 = vlaneseq
    %v83 = vand.u32 %v82, 127
    %vm84 = vcmp.lt.s32.totalorder %v83, 17
    %v85 = vsel %vm84, %v79, %v81
    %v86 = vsel %vm84, %v81, %v79
    %v87 = vld [vmem:[#allocation6] sm:$0xff]
    %v88 = vld [vmem:[#allocation6 + $0x8] sm:$0xff]
    %v89 = vmul.f32 %v86, %v87
    %v90 = vmul.f32 %v85, %v88
    %91 = vrot.lane.b32.xlu0 %v76, 16
    %v92 = vpop.permute.xlu0 %91
    %93 = vrot.lane.b32.xlu0 %v77, 16
    %v94 = vpop.permute.xlu0 %93
    %vm95 = vcmp.lt.s32.totalorder %v83, 16
    %v96 = vsel %vm95, %v92, %v94
    %v97 = vsel %vm95, %v94, %v92
    %v98 = vld [vmem:[#allocation6 + $0x10] sm:$0xff]
    %v99 = vld [vmem:[#allocation6 + $0x18] sm:$0xff]
    %v100 = vmul.f32 %v97, %v98
    %v101 = vmul.f32 %v96, %v99
    %v102 = vadd.f32 %v89, %v100
    %v103 = vadd.f32 %v90, %v101
    %104 = vrot.lane.b32.xlu0 %v76, 15
    %v105 = vpop.permute.xlu0 %104
    %106 = vrot.lane.b32.xlu0 %v77, 15
    %v107 = vpop.permute.xlu0 %106
    %vm108 = vcmp.lt.s32.totalorder %v83, 15
    %v109 = vsel %vm108, %v105, %v107
    %v110 = vsel %vm108, %v107, %v105
    %v111 = vld [vmem:[#allocation6 + $0x20] sm:$0xff]
    %v112 = vld [vmem:[#allocation6 + $0x28] sm:$0xff]
    %v113 = vmul.f32 %v110, %v111
    %v114 = vmul.f32 %v109, %v112
    %v115 = vadd.f32 %v102, %v113
    %v116 = vadd.f32 %v103, %v114
    %117 = vrot.lane.b32.xlu0 %v76, 1
    %v118 = vpop.permute.xlu0 %117
    %119 = vrot.lane.b32.xlu0 %v77, 1
    %v120 = vpop.permute.xlu0 %119
    %vm121 = vcmp.lt.s32.totalorder %v83, 1
    %v122 = vsel %vm121, %v118, %v120
    %v123 = vsel %vm121, %v120, %v118
    %v124 = vld [vmem:[#allocation6 + $0x30] sm:$0xff]
    %v125 = vld [vmem:[#allocation6 + $0x38] sm:$0xff]
    %v126 = vmul.f32 %v123, %v124
    %v127 = vmul.f32 %v122, %v125
    %v128 = vadd.f32 %v115, %v126
    %v129 = vadd.f32 %v116, %v127
    %v130 = vld [vmem:[#allocation6 + $0x40] sm:$0xff]
    %v131 = vld [vmem:[#allocation6 + $0x48] sm:$0xff]
    %v132 = vmul.f32 %v76, %v130
    %v133 = vmul.f32 %v77, %v131
    %v134 = vadd.f32 %v128, %v132
    %v135 = vadd.f32 %v129, %v133
    %136 = vrot.lane.b32.xlu0 %v76, 127
    %v137 = vpop.permute.xlu0 %136
    %138 = vrot.lane.b32.xlu0 %v77, 127
    %v139 = vpop.permute.xlu0 %138
    %vm140 = vcmp.lt.s32.totalorder %v83, 127
    %v141 = vsel %vm140, %v137, %v139
    %v142 = vsel %vm140, %v139, %v137
    %v143 = vld [vmem:[#allocation6 + $0x50] sm:$0xff]
    %v144 = vld [vmem:[#allocation6 + $0x58] sm:$0xff]
    %v145 = vmul.f32 %v141, %v143
    %v146 = vmul.f32 %v142, %v144
    %v147 = vadd.f32 %v134, %v145
    %v148 = vadd.f32 %v135, %v146
    %149 = vrot.lane.b32.xlu0 %v76, 113
    %v150 = vpop.permute.xlu0 %149
    %151 = vrot.lane.b32.xlu0 %v77, 113
    %v152 = vpop.permute.xlu0 %151
    %vm153 = vcmp.lt.s32.totalorder %v83, 113
    %v154 = vsel %vm153, %v150, %v152
    %v155 = vsel %vm153, %v152, %v150
    %v156 = vld [vmem:[#allocation6 + $0x60] sm:$0xff]
    %v157 = vld [vmem:[#allocation6 + $0x68] sm:$0xff]
    %v158 = vmul.f32 %v154, %v156
    %v159 = vmul.f32 %v155, %v157
    %v160 = vadd.f32 %v147, %v158
    %v161 = vadd.f32 %v148, %v159
    %162 = vrot.lane.b32.xlu0 %v76, 112
    %v163 = vpop.permute.xlu0 %162
    %164 = vrot.lane.b32.xlu0 %v77, 112
    %v165 = vpop.permute.xlu0 %164
    %vm166 = vcmp.lt.s32.totalorder %v83, 112
    %v167 = vsel %vm166, %v163, %v165
    %v168 = vsel %vm166, %v165, %v163
    %v169 = vld [vmem:[#allocation6 + $0x70] sm:$0xff]
    %v170 = vld [vmem:[#allocation6 + $0x78] sm:$0xff]
    %v171 = vmul.f32 %v167, %v169
    %v172 = vmul.f32 %v168, %v170
    %v173 = vadd.f32 %v160, %v171
    %v174 = vadd.f32 %v161, %v172
    %175 = vrot.lane.b32.xlu0 %v76, 111
    %v176 = vpop.permute.xlu0 %175
    %177 = vrot.lane.b32.xlu0 %v77, 111
    %v178 = vpop.permute.xlu0 %177
    %vm179 = vcmp.lt.s32.totalorder %v83, 111
    %v180 = vsel %vm179, %v176, %v178
    %v181 = vsel %vm179, %v178, %v176
    %v182 = vld [vmem:[#allocation6 + $0x80] sm:$0xff]
    %v183 = vld [vmem:[#allocation6 + $0x88] sm:$0xff]
    %v184 = vmul.f32 %v180, %v182
    %v185 = vmul.f32 %v181, %v183
    %v186 = vadd.f32 %v173, %v184
    %v187 = vadd.f32 %v174, %v185
    %v188 = vrot.slane %v186, 6
    %v189 = vrot.slane %v187, 6
    %v190 = vadd.f32 %v186, %v188
    %v191 = vadd.f32 %v187, %v189
    %v192 = vrot.slane %v190, 4
    %v193 = vrot.slane %v191, 4
    %v194 = vadd.f32 %v190, %v192
    %v195 = vadd.f32 %v191, %v193
    %s196 = sld [smem:[#allocation9 + $0x3]]
    %v197 = vstv %s196
    %v198 = vadd.f32 %v194, %v197
    %v199 = vadd.f32 %v195, %v197
    %s200 = sld [smem:[#allocation9 + $0x1]]
    %v201 = vstv %s200
    %v202 = vsub.f32 %v198, %v201
    %v203 = vsub.f32 %v199, %v201
    %s204 = sld [smem:[#allocation9]]
    %v205 = vstv %s204
    %v206 = vmul.f32 %v205, %v202
    %v207 = vmul.f32 %v205, %v203
    %v208 = vmul.f32 %v206, %v202
    %v209 = vmul.f32 %v207, %v203
    %s210 = sld [smem:[#allocation9 + $0x2]]
    %v211 = vstv %s210
    %v212 = vadd.f32 %v208, %v211
    %v213 = vadd.f32 %v209, %v211
    %v214 = vsub.f32 0.0, %v212
    %v215 = vsub.f32 0.0, %v213
    %v216 = vmul.f32 %v214, 1.442695
    %v217 = vpow.pop %v216
    %v218 = vmul.f32 %v215, 1.442695
    %v219 = vpow.pop %v218
    %v220 = vadd.f32 %v217, %v219
    %221 = vadd.xlane.f32.xlu0 %v220
    %v222 = vpop.xlane.xlu0 %221
    %v223 = vrot.slane %v222, 4
    %v224 = vadd.f32 %v222, %v223
    %v225 = vrot.slane %v224, 2
    %v226 = vadd.f32 %v224, %v225
    %v227 = vrot.slane %v226, 1
    %v228 = vadd.f32 %v226, %v227
    %s229 = vtos %v228
    %s230 = smul.f32 %s229, 0.00048828125
    %v231 = vstv %s230
    %v232 = vsub.f32 %v217, %v231
    %v233 = vsub.f32 %v219, %v231
    %v234 = vmul.f32 %v232, %v232
    %v235 = vmul.f32 %v233, %v233
    %v236 = vadd.f32 %v234, %v235
    %237 = vadd.xlane.f32.xlu0 %v236
    %v238 = vpop.xlane.xlu0 %237
    %v239 = vrot.slane %v238, 4
    %v240 = vadd.f32 %v238, %v239
    %v241 = vrot.slane %v240, 2
    %v242 = vadd.f32 %v240, %v241
    %v243 = vrot.slane %v242, 1
    %v244 = vadd.f32 %v242, %v243
    %s245 = vtos %v244
    %s246 = smul.f32 %s245, 0.00048828125
    %s247 = sld [smem:[#allocation9 + $0x4]]
    %s248 = sadd.f32 %s246, 1e-05
    %v249 = vstv %s248
    %v250 = vrsqrt.pop %v249
    %v251 = vmul.f32 %v250, %v249
    %v252 = vmul.f32 %v251, %v250
    %v253 = vmul.f32 0.5, %v252
    %v254 = vsub.f32 1.5, %v253
    %v255 = vmul.f32 %v250, %v254
    %vm256 = vweird.f32 %v249
    %vm257 = vweird.f32 %v250
    %vm258 = vmor %vm256, %vm257
    %v259 = vsel %vm258, %v250, %v255
    %s260 = vtos %v259
    %s261 = smul.f32 %s247, %s260
    %v262 = vstv %s261
    %v263 = vmul.f32 %v232, %v262
    %v264 = vmul.f32 %v233, %v262
    %s265 = sld [smem:[#allocation9 + $0x5]]
    %v266 = vstv %s265
    %v267 = vadd.f32 %v263, %v266
    %v268 = vadd.f32 %v264, %v266
    %269 = vrot.lane.b32.xlu0 %v267, 17
    %v270 = vpop.permute.xlu0 %269
    %271 = vrot.lane.b32.xlu0 %v268, 17
    %v272 = vpop.permute.xlu0 %271
    %v273 = vsel %vm84, %v270, %v272
    %v274 = vsel %vm84, %v272, %v270
    %v275 = vld [vmem:[#allocation8] sm:$0xff]
    %v276 = vld [vmem:[#allocation8 + $0x8] sm:$0xff]
    %v277 = vmul.f32 %v274, %v275
    %v278 = vmul.f32 %v273, %v276
    %279 = vrot.lane.b32.xlu0 %v267, 16
    %v280 = vpop.permute.xlu0 %279
    %281 = vrot.lane.b32.xlu0 %v268, 16
    %v282 = vpop.permute.xlu0 %281
    %v283 = vsel %vm95, %v280, %v282
    %v284 = vsel %vm95, %v282, %v280
    %v285 = vld [vmem:[#allocation8 + $0x10] sm:$0xff]
    %v286 = vld [vmem:[#allocation8 + $0x18] sm:$0xff]
    %v287 = vmul.f32 %v284, %v285
    %v288 = vmul.f32 %v283, %v286
    %v289 = vadd.f32 %v277, %v287
    %v290 = vadd.f32 %v278, %v288
    %291 = vrot.lane.b32.xlu0 %v267, 15
    %v292 = vpop.permute.xlu0 %291
    %293 = vrot.lane.b32.xlu0 %v268, 15
    %v294 = vpop.permute.xlu0 %293
    %v295 = vsel %vm108, %v292, %v294
    %v296 = vsel %vm108, %v294, %v292
    %v297 = vld [vmem:[#allocation8 + $0x20] sm:$0xff]
    %v298 = vld [vmem:[#allocation8 + $0x28] sm:$0xff]
    %v299 = vmul.f32 %v296, %v297
    %v300 = vmul.f32 %v295, %v298
    %v301 = vadd.f32 %v289, %v299
    %v302 = vadd.f32 %v290, %v300
    %303 = vrot.lane.b32.xlu0 %v267, 1
    %v304 = vpop.permute.xlu0 %303
    %305 = vrot.lane.b32.xlu0 %v268, 1
    %v306 = vpop.permute.xlu0 %305
    %v307 = vsel %vm121, %v304, %v306
    %v308 = vsel %vm121, %v306, %v304
    %v309 = vld [vmem:[#allocation8 + $0x30] sm:$0xff]
    %v310 = vld [vmem:[#allocation8 + $0x38] sm:$0xff]
    %v311 = vmul.f32 %v308, %v309
    %v312 = vmul.f32 %v307, %v310
    %v313 = vadd.f32 %v301, %v311
    %v314 = vadd.f32 %v302, %v312
    %v315 = vld [vmem:[#allocation8 + $0x40] sm:$0xff]
    %v316 = vld [vmem:[#allocation8 + $0x48] sm:$0xff]
    %v317 = vmul.f32 %v267, %v315
    %v318 = vmul.f32 %v268, %v316
    %v319 = vadd.f32 %v313, %v317
    %v320 = vadd.f32 %v314, %v318
    %321 = vrot.lane.b32.xlu0 %v267, 127
    %v322 = vpop.permute.xlu0 %321
    %323 = vrot.lane.b32.xlu0 %v268, 127
    %v324 = vpop.permute.xlu0 %323
    %v325 = vsel %vm140, %v322, %v324
    %v326 = vsel %vm140, %v324, %v322
    %v327 = vld [vmem:[#allocation8 + $0x50] sm:$0xff]
    %v328 = vld [vmem:[#allocation8 + $0x58] sm:$0xff]
    %v329 = vmul.f32 %v325, %v327
    %v330 = vmul.f32 %v326, %v328
    %v331 = vadd.f32 %v319, %v329
    %v332 = vadd.f32 %v320, %v330
    %333 = vrot.lane.b32.xlu0 %v267, 113
    %v334 = vpop.permute.xlu0 %333
    %335 = vrot.lane.b32.xlu0 %v268, 113
    %v336 = vpop.permute.xlu0 %335
    %v337 = vsel %vm153, %v334, %v336
    %v338 = vsel %vm153, %v336, %v334
    %v339 = vld [vmem:[#allocation8 + $0x60] sm:$0xff]
    %v340 = vld [vmem:[#allocation8 + $0x68] sm:$0xff]
    %v341 = vmul.f32 %v337, %v339
    %v342 = vmul.f32 %v338, %v340
    %v343 = vadd.f32 %v331, %v341
    %v344 = vadd.f32 %v332, %v342
    %345 = vrot.lane.b32.xlu0 %v267, 112
    %v346 = vpop.permute.xlu0 %345
    %347 = vrot.lane.b32.xlu0 %v268, 112
    %v348 = vpop.permute.xlu0 %347
    %v349 = vsel %vm166, %v346, %v348
    %v350 = vsel %vm166, %v348, %v346
    %v351 = vld [vmem:[#allocation8 + $0x70] sm:$0xff]
    %v352 = vld [vmem:[#allocation8 + $0x78] sm:$0xff]
    %v353 = vmul.f32 %v349, %v351
    %v354 = vmul.f32 %v350, %v352
    %v355 = vadd.f32 %v343, %v353
    %v356 = vadd.f32 %v344, %v354
    %357 = vrot.lane.b32.xlu0 %v267, 111
    %v358 = vpop.permute.xlu0 %357
    %359 = vrot.lane.b32.xlu0 %v268, 111
    %v360 = vpop.permute.xlu0 %359
    %v361 = vsel %vm179, %v358, %v360
    %v362 = vsel %vm179, %v360, %v358
    %v363 = vld [vmem:[#allocation8 + $0x80] sm:$0xff]
    %v364 = vld [vmem:[#allocation8 + $0x88] sm:$0xff]
    %v365 = vmul.f32 %v361, %v363
    %v366 = vmul.f32 %v362, %v364
    %v367 = vadd.f32 %v355, %v365
    %v368 = vadd.f32 %v356, %v366
    %s369 = sld [smem:[#allocation9 + $0x6]]
    %v370 = vstv %s369
    %v371 = vadd.f32 %v367, %v370
    %v372 = vadd.f32 %v368, %v370
    %vm373 = vcmask 1041408
    %v374 = vsel %vm373, %v371, 0.0
    %v375 = vsel %vm373, %v372, 0.0
    %v376 = vadd.f32 %v374, %v375
    %377 = vadd.xlane.f32.xlu0 %v376
    %v378 = vpop.xlane.xlu0 %377
    %v379 = vrot.slane %v378, 4
    %v380 = vadd.f32 %v378, %v379
    %v381 = vrot.slane %v380, 2
    %v382 = vadd.f32 %v380, %v381
    %v383 = vrot.slane %v382, 1
    %v384 = vadd.f32 %v382, %v383
    %s385 = vtos %v384
    %s386 = smul.f32 %s385, 0.001953125
    %v387 = vstv %s386
    %v388 = vsub.f32 %v371, %v387
    %v389 = vsub.f32 %v372, %v387
    %v390 = vmul.f32 %v388, %v388
    %v391 = vmul.f32 %v389, %v389
    %v392 = vsel %vm373, %v390, 0.0
    %v393 = vsel %vm373, %v391, 0.0
    %v394 = vadd.f32 %v392, %v393
    %395 = vadd.xlane.f32.xlu0 %v394
    %v396 = vpop.xlane.xlu0 %395
    %v397 = vrot.slane %v396, 4
    %v398 = vadd.f32 %v396, %v397
    %v399 = vrot.slane %v398, 2
    %v400 = vadd.f32 %v398, %v399
    %v401 = vrot.slane %v400, 1
    %v402 = vadd.f32 %v400, %v401
    %s403 = vtos %v402
    %s404 = smul.f32 %s403, 0.001953125
    %s405 = sld [smem:[#allocation9 + $0xa]]
    %s406 = sadd.f32 %s404, 1e-05
    %v407 = vstv %s406
    %v408 = vrsqrt.pop %v407
    %v409 = vmul.f32 %v408, %v407
    %v410 = vmul.f32 %v409, %v408
    %v411 = vmul.f32 0.5, %v410
    %v412 = vsub.f32 1.5, %v411
    %v413 = vmul.f32 %v408, %v412
    %vm414 = vweird.f32 %v407
    %vm415 = vweird.f32 %v408
    %vm416 = vmor %vm414, %vm415
    %v417 = vsel %vm416, %v408, %v413
    %s418 = vtos %v417
    %s419 = smul.f32 %s405, %s418
    %v420 = vstv %s419
    %v421 = vmul.f32 %v388, %v420
    %v422 = vmul.f32 %v389, %v420
    %s423 = sld [smem:[#allocation9 + $0xe]]
    %v424 = vstv %s423
    %v425 = vadd.f32 %v421, %v424
    %v426 = vadd.f32 %v422, %v424
    %s427 = sld [smem:[#allocation9 + $0x7]]
    %v428 = vstv %s427
    %v429 = vadd.f32 %v367, %v428
    %v430 = vadd.f32 %v368, %v428
    %v433 = vrot.slane %v429, 2
    %v434 = vrot.slane %v430, 2
    %v437 = vsel %vm373, %v433, 0.0
    %v438 = vsel %vm373, %v434, 0.0
    %v439 = vadd.f32 %v437, %v438
    %440 = vadd.xlane.f32.xlu0 %v439
    %v441 = vpop.xlane.xlu0 %440
    %v442 = vrot.slane %v441, 4
    %v443 = vadd.f32 %v441, %v442
    %v444 = vrot.slane %v443, 2
    %v445 = vadd.f32 %v443, %v444
    %v446 = vrot.slane %v445, 1
    %v447 = vadd.f32 %v445, %v446
    %s448 = vtos %v447
    %s449 = smul.f32 %s448, 0.001953125
    %v450 = vstv %s449
    %v451 = vsub.f32 %v429, %v450
    %v452 = vsub.f32 %v430, %v450
    %v453 = vmul.f32 %v451, %v451
    %v454 = vmul.f32 %v452, %v452
    %v457 = vrot.slane %v453, 2
    %v458 = vrot.slane %v454, 2
    %v461 = vsel %vm373, %v457, 0.0
    %v462 = vsel %vm373, %v458, 0.0
    %v463 = vadd.f32 %v461, %v462
    %464 = vadd.xlane.f32.xlu0 %v463
    %v465 = vpop.xlane.xlu0 %464
    %v466 = vrot.slane %v465, 4
    %v467 = vadd.f32 %v465, %v466
    %v468 = vrot.slane %v467, 2
    %v469 = vadd.f32 %v467, %v468
    %v470 = vrot.slane %v469, 1
    %v471 = vadd.f32 %v469, %v470
    %s472 = vtos %v471
    %s473 = smul.f32 %s472, 0.001953125
    %s474 = sld [smem:[#allocation9 + $0xb]]
    %s475 = sadd.f32 %s473, 1e-05
    %v476 = vstv %s475
    %v477 = vrsqrt.pop %v476
    %v478 = vmul.f32 %v477, %v476
    %v479 = vmul.f32 %v478, %v477
    %v480 = vmul.f32 0.5, %v479
    %v481 = vsub.f32 1.5, %v480
    %v482 = vmul.f32 %v477, %v481
    %vm483 = vweird.f32 %v476
    %vm484 = vweird.f32 %v477
    %vm485 = vmor %vm483, %vm484
    %v486 = vsel %vm485, %v477, %v482
    %s487 = vtos %v486
    %s488 = smul.f32 %s474, %s487
    %v489 = vstv %s488
    %v490 = vmul.f32 %v451, %v489
    %v491 = vmul.f32 %v452, %v489
    %s492 = sld [smem:[#allocation9 + $0xf]]
    %v493 = vstv %s492
    %v494 = vadd.f32 %v490, %v493
    %v495 = vadd.f32 %v491, %v493
    %s496 = sld [smem:[#allocation9 + $0x8]]
    %v497 = vstv %s496
    %v498 = vadd.f32 %v367, %v497
    %v499 = vadd.f32 %v368, %v497
    %v502 = vrot.slane %v498, 4
    %v503 = vrot.slane %v499, 4
    %v506 = vsel %vm373, %v502, 0.0
    %v507 = vsel %vm373, %v503, 0.0
    %v508 = vadd.f32 %v506, %v507
    %509 = vadd.xlane.f32.xlu0 %v508
    %v510 = vpop.xlane.xlu0 %509
    %v511 = vrot.slane %v510, 4
    %v512 = vadd.f32 %v510, %v511
    %v513 = vrot.slane %v512, 2
    %v514 = vadd.f32 %v512, %v513
    %v515 = vrot.slane %v514, 1
    %v516 = vadd.f32 %v514, %v515
    %s517 = vtos %v516
    %s518 = smul.f32 %s517, 0.001953125
    %v519 = vstv %s518
    %v520 = vsub.f32 %v498, %v519
    %v521 = vsub.f32 %v499, %v519
    %v522 = vmul.f32 %v520, %v520
    %v523 = vmul.f32 %v521, %v521
    %v526 = vrot.slane %v522, 4
    %v527 = vrot.slane %v523, 4
    %v530 = vsel %vm373, %v526, 0.0
    %v531 = vsel %vm373, %v527, 0.0
    %v532 = vadd.f32 %v530, %v531
    %533 = vadd.xlane.f32.xlu0 %v532
    %v534 = vpop.xlane.xlu0 %533
    %v535 = vrot.slane %v534, 4
    %v536 = vadd.f32 %v534, %v535
    %v537 = vrot.slane %v536, 2
    %v538 = vadd.f32 %v536, %v537
    %v539 = vrot.slane %v538, 1
    %v540 = vadd.f32 %v538, %v539
    %s541 = vtos %v540
    %s542 = smul.f32 %s541, 0.001953125
    %s543 = sld [smem:[#allocation9 + $0xc]]
    %s544 = sadd.f32 %s542, 1e-05
    %v545 = vstv %s544
    %v546 = vrsqrt.pop %v545
    %v547 = vmul.f32 %v546, %v545
    %v548 = vmul.f32 %v547, %v546
    %v549 = vmul.f32 0.5, %v548
    %v550 = vsub.f32 1.5, %v549
    %v551 = vmul.f32 %v546, %v550
    %vm552 = vweird.f32 %v545
    %vm553 = vweird.f32 %v546
    %vm554 = vmor %vm552, %vm553
    %v555 = vsel %vm554, %v546, %v551
    %s556 = vtos %v555
    %s557 = smul.f32 %s543, %s556
    %v558 = vstv %s557
    %v559 = vmul.f32 %v520, %v558
    %v560 = vmul.f32 %v521, %v558
    %s561 = sld [smem:[#allocation9 + $0x10]]
    %v562 = vstv %s561
    %v563 = vadd.f32 %v559, %v562
    %v564 = vadd.f32 %v560, %v562
    %s565 = sld [smem:[#allocation9 + $0x9]]
    %v566 = vstv %s565
    %v567 = vadd.f32 %v367, %v566
    %v568 = vadd.f32 %v368, %v566
    %v571 = vrot.slane %v567, 6
    %v572 = vrot.slane %v568, 6
    %v575 = vsel %vm373, %v571, 0.0
    %v576 = vsel %vm373, %v572, 0.0
    %v577 = vadd.f32 %v575, %v576
    %578 = vadd.xlane.f32.xlu0 %v577
    %v579 = vpop.xlane.xlu0 %578
    %v580 = vrot.slane %v579, 4
    %v581 = vadd.f32 %v579, %v580
    %v582 = vrot.slane %v581, 2
    %v583 = vadd.f32 %v581, %v582
    %v584 = vrot.slane %v583, 1
    %v585 = vadd.f32 %v583, %v584
    %s586 = vtos %v585
    %s587 = smul.f32 %s586, 0.001953125
    %v588 = vstv %s587
    %v589 = vsub.f32 %v567, %v588
    %v590 = vsub.f32 %v568, %v588
    %v591 = vmul.f32 %v589, %v589
    %v592 = vmul.f32 %v590, %v590
    %v595 = vrot.slane %v591, 6
    %v596 = vrot.slane %v592, 6
    %v599 = vsel %vm373, %v595, 0.0
    %v600 = vsel %vm373, %v596, 0.0
    %v601 = vadd.f32 %v599, %v600
    %602 = vadd.xlane.f32.xlu0 %v601
    %v603 = vpop.xlane.xlu0 %602
    %v604 = vrot.slane %v603, 4
    %v605 = vadd.f32 %v603, %v604
    %v606 = vrot.slane %v605, 2
    %v607 = vadd.f32 %v605, %v606
    %v608 = vrot.slane %v607, 1
    %v609 = vadd.f32 %v607, %v608
    %s610 = vtos %v609
    %s611 = smul.f32 %s610, 0.001953125
    %s612 = sld [smem:[#allocation9 + $0xd]]
    %s613 = sadd.f32 %s611, 1e-05
    %v614 = vstv %s613
    %v615 = vrsqrt.pop %v614
    %v616 = vmul.f32 %v615, %v614
    %v617 = vmul.f32 %v616, %v615
    %v618 = vmul.f32 0.5, %v617
    %v619 = vsub.f32 1.5, %v618
    %v620 = vmul.f32 %v615, %v619
    %vm621 = vweird.f32 %v614
    %vm622 = vweird.f32 %v615
    %vm623 = vmor %vm621, %vm622
    %v624 = vsel %vm623, %v615, %v620
    %s625 = vtos %v624
    %s626 = smul.f32 %s612, %s625
    %v627 = vstv %s626
    %v628 = vmul.f32 %v589, %v627
    %v629 = vmul.f32 %v590, %v627
    %s630 = sld [smem:[#allocation9 + $0x11]]
    %v631 = vstv %s630
    %v632 = vadd.f32 %v628, %v631
    %v633 = vadd.f32 %v629, %v631
    %v634 = vsel %vm373, %v425, %v494
    %v635 = vsel %vm373, %v426, %v495
    %vm636 = vcmask 1043456
    %v637 = vsel %vm636, %v634, %v563
    %v638 = vsel %vm636, %v635, %v564
    %vm639 = vcmask 1045504
    %v640 = vsel %vm639, %v637, %v632
    %v641 = vsel %vm639, %v638, %v633
    %642 = vst [vmem:[#allocation10] sm:$0xff] %v640
    %643 = vst [vmem:[#allocation10 + $0x8] sm:$0xff] %v641
    // Predicated region
    $region34: #{tpu_custom_call.1} parent=1 // pred_check
      _
    $region35: #{tpu_custom_call.1} parent=1 // pred_check_branch
      %645 = sbr.rel (0) target = $region37
    $region36: #{tpu_custom_call.1} parent=1 // pred_region
      %647 = vsyncadd [#allocation4], 0
      %s649 = sshll.u32 [#allocation10], 4
      %s650 = int_to_ptr.vmem [resolvable:$true] %s649
      %s651 = sshll.u32 %s4, 4
      %s652 = int_to_ptr.hbm [resolvable:$true] %s651
      %654 = dma.vmem_to_hbm [thread:$0]  %s650, 256, %s652, [#allocation4]
    $region37: #{tpu_custom_call.1} parent=1 // pred_fallthru
      _
    // Predicated region
    $region38: #{tpu_custom_call.1} parent=1 // pred_check
      _
    $region39: #{tpu_custom_call.1} parent=1 // pred_check_branch
      %656 = sbr.rel (0) target = $region41
    $region40: #{tpu_custom_call.1} parent=1 // pred_region
      %658 = dma.done [#allocation4], 256
    $region41: #{tpu_custom_call.1} parent=1 // pred_fallthru
      _
    %659 = vsyncpa [#allocation3], 1
    %660 = vsyncpa [#allocation7], 1
    %661 = vsyncpa [#allocation4], 1
    %662 = vsyncpa [#allocation5], 1

</llo_original>
